<compile_context>
chip_gen: v7x
topology: tpu7x:2x2x1
jax: 0.10.0
libtpu: 0.0.40
codegen_flags: <defaults>
</compile_context>

<pallas_src>
import functools

import jax
import jax.numpy as jnp
from jax.experimental import pallas as pl
from jax.experimental.pallas import tpu as pltpu

_LANES = 128
_SUB = 8


def _rh_loss_kernel(pred_ref, tgt_ref, acc_ref, *, max_disp, rows, tile_rows,
                    blocks_per_shard, chunk_rows, unroll):
    c = pl.program_id(0)   # shard axis (TensorCores on v7x / megacore)
    i = pl.program_id(1)   # streaming axis
    n_chunks = tile_rows // chunk_rows
    use_mxu_cnt_fold = chunk_rows > _SUB and chunk_rows % _LANES == 0

    @pl.when(i == 0)
    def _():
        acc_ref[...] = jnp.zeros(acc_ref.shape, acc_ref.dtype)

    blk = c * blocks_per_shard + i          # unclamped logical block index
    row0 = blk * tile_rows                  # global row of this block's first row

    if use_mxu_cnt_fold:
        # (8, chunk) 0/1 matrix: F[s, r] = 1 iff r % 8 == s.  dot(F, x) equals
        # x.reshape(-1, 8, 128).sum(0); with exactly bf16-representable 0/1
        # operands the MXU result is exact at any matmul precision, so the
        # count fold is free VALU savings with zero numerical risk.
        fold = (
            (jax.lax.broadcasted_iota(jnp.int32, (_SUB, chunk_rows), 1) & (_SUB - 1))
            == jax.lax.broadcasted_iota(jnp.int32, (_SUB, chunk_rows), 0)
        ).astype(jnp.float32)

    def vpu_fold(x):
        if chunk_rows == _SUB:
            return x
        return x.reshape(-1, _SUB, _LANES).sum(axis=0)

    def cnt_fold(x):
        if use_mxu_cnt_fold:
            # Offload the count fold to the otherwise-idle MXU.
            return jax.lax.dot(fold, x, preferred_element_type=jnp.float32)
        return vpu_fold(x)

    def smooth_l1(o, t):
        d = o - t
        ad = jnp.abs(d)
        # SmoothL1 with beta = 1 (PyTorch default)
        return jnp.where(ad < 1.0, 0.5 * d * d, ad - 0.5)

    def accumulate(mask_fn):
        def body(ci, carry):
            s_acc, c_acc = carry
            r = pl.multiple_of(ci * chunk_rows, chunk_rows)
            o = pred_ref[pl.ds(r, chunk_rows), :].astype(jnp.float32)
            t = tgt_ref[pl.ds(r, chunk_rows), :].astype(jnp.float32)
            mask = mask_fn(t, ci)
            # Select (NOT multiply-by-mask): boundary blocks may read
            # uninitialized data past `rows`; NaN * 0 would propagate.
            elem = jnp.where(mask, smooth_l1(o, t), 0.0)
            cnt = mask.astype(jnp.float32)
            return s_acc + vpu_fold(elem), c_acc + cnt_fold(cnt)

        zero = jnp.zeros((_SUB, _LANES), jnp.float32)
        s_acc, c_acc = jax.lax.fori_loop(0, n_chunks, body, (zero, zero),
                                         unroll=unroll)
        acc_ref[0] += s_acc
        acc_ref[1] += c_acc

    full_block = (blk + 1) * tile_rows <= rows

    @pl.when(full_block)
    def _():
        # Interior block: every row is real data -> cheap mask (no iota work).
        accumulate(lambda t, ci: t < jnp.float32(max_disp))

    @pl.when(jnp.logical_not(full_block))
    def _():
        # Ragged boundary block / clamped shard iteration: add the row mask.
        def mask_fn(t, ci):
            rid = (row0 + ci * chunk_rows
                   + jax.lax.broadcasted_iota(jnp.int32, (chunk_rows, _LANES), 0))
            return jnp.logical_and(t < jnp.float32(max_disp), rid < rows)
        accumulate(mask_fn)


def _device_defaults():
    """(tile_rows, num_shards, shard-axis semantics, VMEM cap) per chip kind."""
    kind = jax.devices()[0].device_kind.lower()
    if "v7" in kind or "tpu7" in kind:
        # 2 TensorCores/chip, ~3.2 TB/s HBM, 64 MiB physical VMEM.
        return 8192, 2, pltpu.CORE_PARALLEL, 48 << 20
    if "v5p" in kind or "v4" in kind:
        # Megacore: "parallel" grid axes are sharded across the 2 TCs.
        return 4096, 2, pltpu.PARALLEL, 96 << 20
    # v5e / v6e (and fallback): single TensorCore, 128 MiB physical VMEM.
    return 4096, 1, pltpu.ARBITRARY, 96 << 20


def rh_loss(left_img, right_img, output, target, weight, *, max_disp,
            tile_rows=None, num_shards=None):
    del left_img, right_img  # unused in the reference forward pass

    pred = output.reshape(-1)
    tgt = target.reshape(-1)
    n = pred.shape[0]
    itemsize = jnp.dtype(pred.dtype).itemsize
    # Sublane packing multiple: 8 for f32, 16 for bf16, 32 for int8/fp8.
    sub_mult = _SUB * max(1, 4 // itemsize)

    dev_tile, dev_shards, shard_sem, vmem_cap = _device_defaults()
    if tile_rows is None:
        tile_rows = dev_tile
    if num_shards is None:
        num_shards = dev_shards

    # Round the requested tile up to the sublane multiple (the in-kernel fold
    # and the (8,128) BlockSpec divisibility rule need it).
    tile_rows = max(sub_mult, -(-tile_rows // sub_mult) * sub_mult)

    # Minimal tail pad so a free (rows, 128) view exists.  For typical disparity
    # maps numel % 128 == 0 and no copy happens.  Padded targets are set to
    # max_disp so they fall outside the mask.
    pad_elems = (-n) % _LANES
    rows = (n + pad_elems) // _LANES
    pad_rows = (-rows) % sub_mult if (rows % sub_mult != 0 and rows < tile_rows) else 0
    total_pad = pad_elems + pad_rows * _LANES
    if total_pad:
        pred = jnp.pad(pred, (0, total_pad))
        tgt = jnp.pad(tgt, (0, total_pad), constant_values=float(max_disp))
    rows = rows + pad_rows

    pred2d = pred.reshape(rows, _LANES)
    tgt2d = tgt.reshape(rows, _LANES)

    tr = min(tile_rows, rows)               # multiple of sub_mult by construction
    nblocks = pl.cdiv(rows, tr)
    shards = num_shards if nblocks >= num_shards else 1
    bps = pl.cdiv(nblocks, shards)          # blocks per shard

    # Sub-chunk of the tile processed per unrolled-loop step: bounds the f32
    # intermediates (d, |d|, elem, mask, ...) to <=512x128 (256 KiB) and keeps
    # the (8,128) partial sums vreg-resident regardless of streaming tile size.
    chunk = tr
    for cand in (512, 256, 128, 64, 32, 16, 8):
        if cand >= sub_mult and tr % cand == 0:
            chunk = cand
            break
    n_chunks = tr // chunk
    unroll = True if n_chunks <= 16 else 8

    # Explicit VMEM budget: 2 inputs x 2 pipeline buffers x tile + headroom, so
    # the scoped default (16 MiB on v5e) never clips the pipeline.
    vmem_limit = int(min(vmem_cap,
                         max(32 << 20, 4 * tr * _LANES * itemsize + (8 << 20))))

    kernel = functools.partial(
        _rh_loss_kernel, max_disp=float(max_disp), rows=rows, tile_rows=tr,
        blocks_per_shard=bps, chunk_rows=chunk, unroll=unroll)

    def in_map(c, i):
        # Clamp so over-allocated shard iterations re-read the last valid block;
        # their rows are fully masked out on the kernel's boundary path.
        return (jnp.minimum(c * bps + i, nblocks - 1), 0)

    axis0_sem = shard_sem if shards > 1 else pltpu.ARBITRARY

    partials = pl.pallas_call(
        kernel,
        out_shape=jax.ShapeDtypeStruct((shards, 2, _SUB, _LANES), jnp.float32),
        grid_spec=pltpu.PrefetchScalarGridSpec(
            num_scalar_prefetch=0,
            grid=(shards, bps),
            in_specs=[
                pl.BlockSpec((tr, _LANES), in_map),
                pl.BlockSpec((tr, _LANES), in_map),
            ],
            out_specs=pl.BlockSpec((None, 2, _SUB, _LANES),
                                   lambda c, i: (c, 0, 0, 0)),
        ),
        compiler_params=pltpu.CompilerParams(
            dimension_semantics=(axis0_sem, pltpu.ARBITRARY),
            vmem_limit_bytes=vmem_limit),
        cost_estimate=pl.CostEstimate(
            flops=10 * rows * _LANES,
            transcendentals=0,
            bytes_accessed=2 * itemsize * rows * _LANES
                           + shards * 2 * _SUB * _LANES * 4),
    )(pred2d, tgt2d)

    # Final cross-lane/sublane reduce + mean + weight scaling: scalar glue in JAX.
    loss_sum = jnp.sum(partials[:, 0])
    mask_cnt = jnp.sum(partials[:, 1])
    # NOTE: empty mask -> 0/0 = NaN, matching PyTorch SmoothL1Loss(mean); f32
    # accumulation matches PyTorch (counts > 2^24 lose integer exactness).
    return weight * (loss_sum / mask_cnt)


def _reference(output, target, weight, max_disp):
    """Pure-JAX reference reproducing the PyTorch module."""
    mask = target < max_disp
    d = output - target
    ad = jnp.abs(d)
    elem = jnp.where(ad < 1.0, 0.5 * d * d, ad - 0.5)
    s = jnp.sum(jnp.where(mask, elem, 0.0))
    c = jnp.sum(mask.astype(jnp.float32))
    return weight * (s / c)


if __name__ == "__main__":
    key = jax.random.PRNGKey(0)
    k1, k2, k3, k4, k5, k6, k7, k8 = jax.random.split(key, 8)

    MAX_DISP = 192
    B, C, H, W = 2, 3, 16, 16

    # left/right images (unused by the loss, present for signature parity)
    left_img = jax.random.normal(k1, (B, C, H, W), dtype=jnp.float32)
    right_img = jax.random.normal(k2, (B, C, H, W), dtype=jnp.float32)

    # Test 1: module-scale shapes, single aligned block, interior path only.
    output = jax.random.uniform(k3, (B, H, W), dtype=jnp.float32,
                                minval=0.0, maxval=250.0)
    target = jax.random.uniform(k4, (B, H, W), dtype=jnp.float32,
                                minval=0.0, maxval=250.0)
    weight = jnp.float32(0.7)

    loss = rh_loss(left_img, right_img, output, target, weight,
                   max_disp=MAX_DISP)
    loss = jax.block_until_ready(loss)
    ref = _reference(output, target, weight, MAX_DISP)
    assert jnp.allclose(loss, ref, rtol=1e-5, atol=1e-6), (loss, ref)

    # Test 2: ragged size (not a multiple of 128), multi-block grid, forced
    # 2-way shard axis -> boundary-block + clamped-shard-iteration paths.
    out2 = jax.random.uniform(k5, (2, 30, 40), dtype=jnp.float32,
                              minval=0.0, maxval=250.0)
    tgt2 = jax.random.uniform(k6, (2, 30, 40), dtype=jnp.float32,
                              minval=0.0, maxval=250.0)
    loss2 = rh_loss(left_img, right_img, out2, tgt2, weight,
                    max_disp=MAX_DISP, tile_rows=8, num_shards=2)
    loss2 = jax.block_until_ready(loss2)
    ref2 = _reference(out2, tgt2, weight, MAX_DISP)
    assert jnp.allclose(loss2, ref2, rtol=1e-5, atol=1e-6), (loss2, ref2)

    # Test 3: larger ragged map with a bigger tile -> exercises the chunked
    # inner loop, the MXU count fold and the interior/boundary pl.when split.
    out3 = jax.random.uniform(k7, (2, 72, 128), dtype=jnp.float32,
                              minval=0.0, maxval=250.0)
    tgt3 = jax.random.uniform(k8, (2, 72, 128), dtype=jnp.float32,
                              minval=0.0, maxval=250.0)
    loss3 = rh_loss(left_img, right_img, out3, tgt3, weight,
                    max_disp=MAX_DISP, tile_rows=128)
    loss3 = jax.block_until_ready(loss3)
    ref3 = _reference(out3, tgt3, weight, MAX_DISP)
    assert jnp.allclose(loss3, ref3, rtol=1e-4, atol=1e-5), (loss3, ref3)

    print("KERNEL_OK")
</pallas_src>

<mosaic_0001>
module attributes {stable_mosaic.version = 11 : i64} {
  func.func @_rh_loss_kernel(%arg0: i32, %arg1: i32, %arg2: memref<8x128xf32, #tpu.memory_space<vmem>>, %arg3: memref<8x128xf32, #tpu.memory_space<vmem>>, %arg4: memref<1x2x8x128xf32, #tpu.memory_space<vmem>>) attributes {dimension_semantics = [#tpu.dimension_semantics<arbitrary>, #tpu.dimension_semantics<arbitrary>], iteration_bounds = array<i64: 1, 1>, scalar_prefetch = 0 : i64, scratch_operands = 0 : i64, tpu.core_type = #tpu.core_type<tc>, window_params = [{transform_indices = @transform_0, window_bounds = array<i64: 8, 128>}, {transform_indices = @transform_1, window_bounds = array<i64: 8, 128>}, {transform_indices = @transform_2, window_bounds = array<i64: 1, 2, 8, 128>}]} {
    %c0_i32 = arith.constant 0 : i32
    %0 = arith.cmpi eq, %arg1, %c0_i32 : i32
    %1 = arith.extui %0 : i1 to i32
    %c0_i32_0 = arith.constant 0 : i32
    %2 = arith.cmpi ne, %1, %c0_i32_0 : i32
    scf.if %2 {
      %cst = arith.constant 0.000000e+00 : f32
      %14 = vector.broadcast %cst : f32 to vector<2x8x128xf32>
      %c0 = arith.constant 0 : index
      %c0_6 = arith.constant 0 : index
      %c0_7 = arith.constant 0 : index
      %c0_8 = arith.constant 0 : index
      %15 = vector.load %arg4[%c0, %c0_6, %c0_7, %c0_8] : memref<1x2x8x128xf32, #tpu.memory_space<vmem>>, vector<1x2x8x128xf32>
      %16 = vector.shape_cast %15 : vector<1x2x8x128xf32> to vector<2x8x128xf32>
      %17 = vector.shape_cast %14 : vector<2x8x128xf32> to vector<1x2x8x128xf32>
      tpu.vector_store %arg4[%c0, %c0_6, %c0_7, %c0_8], %17 {strides = array<i32>} : memref<1x2x8x128xf32, #tpu.memory_space<vmem>>, vector<1x2x8x128xf32>,
    } else {
    }
    %c1_i32 = arith.constant 1 : i32
    %3 = arith.muli %arg0, %c1_i32 : i32
    %4 = arith.addi %3, %arg1 : i32
    %c8_i32 = arith.constant 8 : i32
    %5 = arith.muli %4, %c8_i32 : i32
    %c1_i32_1 = arith.constant 1 : i32
    %6 = arith.addi %4, %c1_i32_1 : i32
    %c8_i32_2 = arith.constant 8 : i32
    %7 = arith.muli %6, %c8_i32_2 : i32
    %c8_i32_3 = arith.constant 8 : i32
    %8 = arith.cmpi sle, %7, %c8_i32_3 : i32
    %9 = arith.extui %8 : i1 to i32
    %c0_i32_4 = arith.constant 0 : i32
    %10 = arith.cmpi ne, %9, %c0_i32_4 : i32
    scf.if %10 {
      %cst = arith.constant 0.000000e+00 : f32
      %14 = vector.broadcast %cst : f32 to vector<8x128xf32>
      %c0_i32_6 = arith.constant 0 : i32
      %c8_i32_7 = arith.constant 8 : i32
      %15 = arith.muli %c0_i32_6, %c8_i32_7 : i32
      %16 = tpu.assume_multiple %15, 8 : i32
      %17 = arith.index_cast %16 : i32 to index
      %c0 = arith.constant 0 : index
      %18 = vector.load %arg2[%17, %c0] : memref<8x128xf32, #tpu.memory_space<vmem>>, vector<8x128xf32>
      %19 = arith.index_cast %16 : i32 to index
      %c0_8 = arith.constant 0 : index
      %20 = vector.load %arg3[%19, %c0_8] : memref<8x128xf32, #tpu.memory_space<vmem>>, vector<8x128xf32>
      %cst_9 = arith.constant 1.920000e+02 : f32
      %21 = vector.broadcast %cst_9 : f32 to vector<8x128xf32>
      %22 = arith.cmpf olt, %20, %21 : vector<8x128xf32>
      %23 = arith.subf %18, %20 : vector<8x128xf32>
      %24 = math.absf %23 : vector<8x128xf32>
      %cst_10 = arith.constant 1.000000e+00 : f32
      %25 = vector.broadcast %cst_10 : f32 to vector<8x128xf32>
      %26 = arith.cmpf olt, %24, %25 : vector<8x128xf32>
      %cst_11 = arith.constant 5.000000e-01 : f32
      %27 = vector.broadcast %cst_11 : f32 to vector<8x128xf32>
      %28 = arith.mulf %27, %23 : vector<8x128xf32>
      %29 = arith.mulf %28, %23 : vector<8x128xf32>
      %cst_12 = arith.constant 5.000000e-01 : f32
      %30 = vector.broadcast %cst_12 : f32 to vector<8x128xf32>
      %31 = arith.subf %24, %30 : vector<8x128xf32>
      %32 = arith.select %26, %29, %31 : vector<8x128xi1>, vector<8x128xf32>
      %cst_13 = arith.constant 0.000000e+00 : f32
      %33 = vector.broadcast %cst_13 : f32 to vector<8x128xf32>
      %34 = arith.select %22, %32, %33 : vector<8x128xi1>, vector<8x128xf32>
      %35 = arith.extui %22 : vector<8x128xi1> to vector<8x128xi32>
      %36 = arith.sitofp %35 : vector<8x128xi32> to vector<8x128xf32>
      %37 = arith.addf %14, %34 : vector<8x128xf32>
      %38 = arith.addf %14, %36 : vector<8x128xf32>
      %c1_i32_14 = arith.constant 1 : i32
      %c0_15 = arith.constant 0 : index
      %c0_16 = arith.constant 0 : index
      %c0_17 = arith.constant 0 : index
      %c0_18 = arith.constant 0 : index
      %39 = vector.load %arg4[%c0_15, %c0_16, %c0_17, %c0_18] : memref<1x2x8x128xf32, #tpu.memory_space<vmem>>, vector<1x1x8x128xf32>
      %40 = vector.shape_cast %39 : vector<1x1x8x128xf32> to vector<8x128xf32>
      %41 = arith.addf %40, %37 : vector<8x128xf32>
      %c0_19 = arith.constant 0 : index
      %c0_20 = arith.constant 0 : index
      %c0_21 = arith.constant 0 : index
      %c0_22 = arith.constant 0 : index
      %42 = vector.load %arg4[%c0_19, %c0_20, %c0_21, %c0_22] : memref<1x2x8x128xf32, #tpu.memory_space<vmem>>, vector<1x1x8x128xf32>
      %43 = vector.shape_cast %42 : vector<1x1x8x128xf32> to vector<8x128xf32>
      %44 = vector.shape_cast %41 : vector<8x128xf32> to vector<1x1x8x128xf32>
      tpu.vector_store %arg4[%c0_19, %c0_20, %c0_21, %c0_22], %44 {strides = array<i32>} : memref<1x2x8x128xf32, #tpu.memory_space<vmem>>, vector<1x1x8x128xf32>,
      %c0_23 = arith.constant 0 : index
      %c1 = arith.constant 1 : index
      %c0_24 = arith.constant 0 : index
      %c0_25 = arith.constant 0 : index
      %45 = vector.load %arg4[%c0_23, %c1, %c0_24, %c0_25] : memref<1x2x8x128xf32, #tpu.memory_space<vmem>>, vector<1x1x8x128xf32>
      %46 = vector.shape_cast %45 : vector<1x1x8x128xf32> to vector<8x128xf32>
      %47 = arith.addf %46, %38 : vector<8x128xf32>
      %c0_26 = arith.constant 0 : index
      %c1_27 = arith.constant 1 : index
      %c0_28 = arith.constant 0 : index
      %c0_29 = arith.constant 0 : index
      %48 = vector.load %arg4[%c0_26, %c1_27, %c0_28, %c0_29] : memref<1x2x8x128xf32, #tpu.memory_space<vmem>>, vector<1x1x8x128xf32>
      %49 = vector.shape_cast %48 : vector<1x1x8x128xf32> to vector<8x128xf32>
      %50 = vector.shape_cast %47 : vector<8x128xf32> to vector<1x1x8x128xf32>
      tpu.vector_store %arg4[%c0_26, %c1_27, %c0_28, %c0_29], %50 {strides = array<i32>} : memref<1x2x8x128xf32, #tpu.memory_space<vmem>>, vector<1x1x8x128xf32>,
    } else {
    }
    %true = arith.constant true
    %11 = arith.xori %8, %true : i1
    %12 = arith.extui %11 : i1 to i32
    %c0_i32_5 = arith.constant 0 : i32
    %13 = arith.cmpi ne, %12, %c0_i32_5 : i32
    scf.if %13 {
      %cst = arith.constant 0.000000e+00 : f32
      %14 = vector.broadcast %cst : f32 to vector<8x128xf32>
      %c0_i32_6 = arith.constant 0 : i32
      %c8_i32_7 = arith.constant 8 : i32
      %15 = arith.muli %c0_i32_6, %c8_i32_7 : i32
      %16 = tpu.assume_multiple %15, 8 : i32
      %17 = arith.index_cast %16 : i32 to index
      %c0 = arith.constant 0 : index
      %18 = vector.load %arg2[%17, %c0] : memref<8x128xf32, #tpu.memory_space<vmem>>, vector<8x128xf32>
      %19 = arith.index_cast %16 : i32 to index
      %c0_8 = arith.constant 0 : index
      %20 = vector.load %arg3[%19, %c0_8] : memref<8x128xf32, #tpu.memory_space<vmem>>, vector<8x128xf32>
      %c8_i32_9 = arith.constant 8 : i32
      %21 = arith.muli %c0_i32_6, %c8_i32_9 : i32
      %22 = arith.addi %5, %21 : i32
      %23 = tpu.iota {dimensions = array<i32: 0>} : vector<8x128xi32>
      %24 = vector.broadcast %22 : i32 to vector<8x128xi32>
      %25 = arith.addi %24, %23 : vector<8x128xi32>
      %cst_10 = arith.constant 1.920000e+02 : f32
      %26 = vector.broadcast %cst_10 : f32 to vector<8x128xf32>
      %27 = arith.cmpf olt, %20, %26 : vector<8x128xf32>
      %c8_i32_11 = arith.constant 8 : i32
      %28 = vector.broadcast %c8_i32_11 : i32 to vector<8x128xi32>
      %29 = arith.cmpi slt, %25, %28 : vector<8x128xi32>
      %30 = arith.andi %27, %29 : vector<8x128xi1>
      %31 = arith.subf %18, %20 : vector<8x128xf32>
      %32 = math.absf %31 : vector<8x128xf32>
      %cst_12 = arith.constant 1.000000e+00 : f32
      %33 = vector.broadcast %cst_12 : f32 to vector<8x128xf32>
      %34 = arith.cmpf olt, %32, %33 : vector<8x128xf32>
      %cst_13 = arith.constant 5.000000e-01 : f32
      %35 = vector.broadcast %cst_13 : f32 to vector<8x128xf32>
      %36 = arith.mulf %35, %31 : vector<8x128xf32>
      %37 = arith.mulf %36, %31 : vector<8x128xf32>
      %cst_14 = arith.constant 5.000000e-01 : f32
      %38 = vector.broadcast %cst_14 : f32 to vector<8x128xf32>
      %39 = arith.subf %32, %38 : vector<8x128xf32>
      %40 = arith.select %34, %37, %39 : vector<8x128xi1>, vector<8x128xf32>
      %cst_15 = arith.constant 0.000000e+00 : f32
      %41 = vector.broadcast %cst_15 : f32 to vector<8x128xf32>
      %42 = arith.select %30, %40, %41 : vector<8x128xi1>, vector<8x128xf32>
      %43 = arith.extui %30 : vector<8x128xi1> to vector<8x128xi32>
      %44 = arith.sitofp %43 : vector<8x128xi32> to vector<8x128xf32>
      %45 = arith.addf %14, %42 : vector<8x128xf32>
      %46 = arith.addf %14, %44 : vector<8x128xf32>
      %c1_i32_16 = arith.constant 1 : i32
      %c0_17 = arith.constant 0 : index
      %c0_18 = arith.constant 0 : index
      %c0_19 = arith.constant 0 : index
      %c0_20 = arith.constant 0 : index
      %47 = vector.load %arg4[%c0_17, %c0_18, %c0_19, %c0_20] : memref<1x2x8x128xf32, #tpu.memory_space<vmem>>, vector<1x1x8x128xf32>
      %48 = vector.shape_cast %47 : vector<1x1x8x128xf32> to vector<8x128xf32>
      %49 = arith.addf %48, %45 : vector<8x128xf32>
      %c0_21 = arith.constant 0 : index
      %c0_22 = arith.constant 0 : index
      %c0_23 = arith.constant 0 : index
      %c0_24 = arith.constant 0 : index
      %50 = vector.load %arg4[%c0_21, %c0_22, %c0_23, %c0_24] : memref<1x2x8x128xf32, #tpu.memory_space<vmem>>, vector<1x1x8x128xf32>
      %51 = vector.shape_cast %50 : vector<1x1x8x128xf32> to vector<8x128xf32>
      %52 = vector.shape_cast %49 : vector<8x128xf32> to vector<1x1x8x128xf32>
      tpu.vector_store %arg4[%c0_21, %c0_22, %c0_23, %c0_24], %52 {strides = array<i32>} : memref<1x2x8x128xf32, #tpu.memory_space<vmem>>, vector<1x1x8x128xf32>,
      %c0_25 = arith.constant 0 : index
      %c1 = arith.constant 1 : index
      %c0_26 = arith.constant 0 : index
      %c0_27 = arith.constant 0 : index
      %53 = vector.load %arg4[%c0_25, %c1, %c0_26, %c0_27] : memref<1x2x8x128xf32, #tpu.memory_space<vmem>>, vector<1x1x8x128xf32>
      %54 = vector.shape_cast %53 : vector<1x1x8x128xf32> to vector<8x128xf32>
      %55 = arith.addf %54, %46 : vector<8x128xf32>
      %c0_28 = arith.constant 0 : index
      %c1_29 = arith.constant 1 : index
      %c0_30 = arith.constant 0 : index
      %c0_31 = arith.constant 0 : index
      %56 = vector.load %arg4[%c0_28, %c1_29, %c0_30, %c0_31] : memref<1x2x8x128xf32, #tpu.memory_space<vmem>>, vector<1x1x8x128xf32>
      %57 = vector.shape_cast %56 : vector<1x1x8x128xf32> to vector<8x128xf32>
      %58 = vector.shape_cast %55 : vector<8x128xf32> to vector<1x1x8x128xf32>
      tpu.vector_store %arg4[%c0_28, %c1_29, %c0_30, %c0_31], %58 {strides = array<i32>} : memref<1x2x8x128xf32, #tpu.memory_space<vmem>>, vector<1x1x8x128xf32>,
    } else {
    }
    return
  }
  func.func @transform_0(%arg0: i32, %arg1: i32) -> (i32, i32) {
    %c1_i32 = arith.constant 1 : i32
    %0 = arith.muli %arg0, %c1_i32 : i32
    %1 = arith.addi %0, %arg1 : i32
    %c0_i32 = arith.constant 0 : i32
    %2 = arith.minsi %1, %c0_i32 : i32
    %c0_i32_0 = arith.constant 0 : i32
    %c0_i32_1 = arith.constant 0 : i32
    return %2, %c0_i32_0 : i32, i32
  }
  func.func @transform_1(%arg0: i32, %arg1: i32) -> (i32, i32) {
    %c1_i32 = arith.constant 1 : i32
    %0 = arith.muli %arg0, %c1_i32 : i32
    %1 = arith.addi %0, %arg1 : i32
    %c0_i32 = arith.constant 0 : i32
    %2 = arith.minsi %1, %c0_i32 : i32
    %c0_i32_0 = arith.constant 0 : i32
    %c0_i32_1 = arith.constant 0 : i32
    return %2, %c0_i32_0 : i32, i32
  }
  func.func @transform_2(%arg0: i32, %arg1: i32) -> (i32, i32, i32, i32) {
    %c0_i32 = arith.constant 0 : i32
    %c0_i32_0 = arith.constant 0 : i32
    %c0_i32_1 = arith.constant 0 : i32
    %c0_i32_2 = arith.constant 0 : i32
    return %arg0, %c0_i32, %c0_i32_0, %c0_i32_1 : i32, i32, i32, i32
  }
}

</mosaic_0001>

<llo_original>
// kernel: tpu_custom_call.1
$region0: #{tpu_custom_call.1}
  #allocation0 [shape = 'u32[]', space=smem, size = 0x4, offset = 0x4, fixed_abs, tag = 'smem constant byte address 0x4 - core index']
  #allocation1 [shape = 'u32[144,128]{1,0:T(1,128)}', space=vmem, size = 0x12000, scoped, tag = 'internal scratch']
  %s0 = inlined_call_operand.hbm [shape: f32[8,128], index: 0, kind: input, shape index: {}]
  %s1 = inlined_call_operand.hbm [shape: f32[8,128], index: 1, kind: input, shape index: {}]
  %s2 = inlined_call_operand.hbm [shape: f32[1,2,8,128], index: 2, kind: output, shape index: {}]
  %s3 = sld [smem:[#allocation0]]
  $region38: #{tpu_custom_call.1} parent=0
    _
  %s5 = ssub.s32 1, %s3
  %s6 = scalar_select 0, %s5, %s3
  $region1: #{tpu_custom_call.1} parent=0
    #allocation2 [shape = 'u8[4096]{0}', space=vmem, size = 0x1000, scoped, tag = 'input window, operand 0, single buffered']
    #allocation3 [shape = 's32[1]{0}', space=sflag, size = 0x4, scoped, tag = 'scoped memory for tpu_custom_call.1']
    #allocation4 [shape = 's32[1]{0}', space=sflag, size = 0x4, scoped, tag = 'scoped memory for tpu_custom_call.1']
    #allocation5 [shape = 'u8[4096]{0}', space=vmem, size = 0x1000, scoped, tag = 'input window, operand 1, single buffered']
    #allocation6 [shape = 's32[1]{0}', space=sflag, size = 0x4, scoped, tag = 'scoped memory for tpu_custom_call.1']
    #allocation7 [shape = 'u8[8192]{0}', space=vmem, size = 0x2000, scoped, tag = 'output window, operand 0, single buffered']
    %7 = vsyncpa [#allocation3], 0
    %8 = vsyncpa [#allocation6], 0
    %9 = vsyncpa [#allocation4], 0
    // Predicated region
    $region2: #{tpu_custom_call.1} parent=1 // pred_check
      _
    $region3: #{tpu_custom_call.1} parent=1 // pred_check_branch
      %11 = sbr.rel (0) target = $region5
    $region4: #{tpu_custom_call.1} parent=1 // pred_region
      %s12 = sadd.s32 0, 0
      %p13 = scmp.lt.s32.totalorder %s12, 0
      %s14 = scalar_select %p13, %s12, 0
      %s16 = ssub.s32 128, 128
      %17 = vsyncadd [#allocation3], %s16
      %s18 = smul.addr %s14, 128
      %s19 = scalar_lea.hbm %s0, %s18
      %s21 = sshll.u32 [#allocation2], 4
      %s22 = int_to_ptr.vmem [resolvable:$true] %s21
      %24 = dma.hbm_to_vmem [thread:$0]  %s19, 128, %s22, [#allocation3]
    $region5: #{tpu_custom_call.1} parent=1 // pred_fallthru
      _
    // Predicated region
    $region6: #{tpu_custom_call.1} parent=1 // pred_check
      _
    $region7: #{tpu_custom_call.1} parent=1 // pred_check_branch
      %26 = sbr.rel (0) target = $region9
    $region8: #{tpu_custom_call.1} parent=1 // pred_region
      %s27 = sadd.s32 0, 0
      %p28 = scmp.lt.s32.totalorder %s27, 0
      %s29 = scalar_select %p28, %s27, 0
      %s31 = ssub.s32 128, 128
      %32 = vsyncadd [#allocation6], %s31
      %s33 = smul.addr %s29, 128
      %s34 = scalar_lea.hbm %s1, %s33
      %s36 = sshll.u32 [#allocation5], 4
      %s37 = int_to_ptr.vmem [resolvable:$true] %s36
      %39 = dma.hbm_to_vmem [thread:$0]  %s34, 128, %s37, [#allocation6]
    $region9: #{tpu_custom_call.1} parent=1 // pred_fallthru
      _
    // Predicated region
    $region10: #{tpu_custom_call.1} parent=1 // pred_check
      _
    $region11: #{tpu_custom_call.1} parent=1 // pred_check_branch
      %41 = sbr.rel (0) target = $region13
    $region12: #{tpu_custom_call.1} parent=1 // pred_region
      %42 = dma.done [#allocation3], 128
    $region13: #{tpu_custom_call.1} parent=1 // pred_fallthru
      _
    // Predicated region
    $region14: #{tpu_custom_call.1} parent=1 // pred_check
      _
    $region15: #{tpu_custom_call.1} parent=1 // pred_check_branch
      %44 = sbr.rel (0) target = $region17
    $region16: #{tpu_custom_call.1} parent=1 // pred_region
      %45 = dma.done [#allocation6], 128
    $region17: #{tpu_custom_call.1} parent=1 // pred_fallthru
      _
    %s46 = sadd.s32 0, 0
    %p47 = scmp.lt.s32.totalorder %s46, 0
    %s48 = scalar_select %p47, %s46, 0
    %s49 = sadd.s32 0, 0
    %p50 = scmp.lt.s32.totalorder %s49, 0
    %s51 = scalar_select %p50, %s49, 0
    %p52 = scmp.eq.s32.totalorder 0, 0
    // Predicated region
    $region18: #{tpu_custom_call.1} parent=1 // pred_check
      %p53 = pneg %p52
    $region19: #{tpu_custom_call.1} parent=1 // pred_check_branch
      %55 = sbr.rel (%p53) target = $region21
    $region20: #{tpu_custom_call.1} parent=1 // pred_region
      %56 = vst [vmem:[#allocation7] sm:$0xff] 0.0
      %57 = vst [vmem:[#allocation7 + $0x8] sm:$0xff] 0.0
    $region21: #{tpu_custom_call.1} parent=1 // pred_fallthru
      _
    %s58 = sadd.s32 0, 0
    %s59 = smul.u32 %s58, 8
    %s60 = sadd.s32 %s58, 1
    %s61 = smul.u32 %s60, 8
    %p62 = scmp.le.s32.totalorder %s61, 8
    // Predicated region
    $region22: #{tpu_custom_call.1} parent=1 // pred_check
      %p63 = pneg %p62
    $region23: #{tpu_custom_call.1} parent=1 // pred_check_branch
      %65 = sbr.rel (%p63) target = $region25
    $region24: #{tpu_custom_call.1} parent=1 // pred_region
      %v66 = vld [vmem:[#allocation2] sm:$0xff]
      %v67 = vld [vmem:[#allocation5] sm:$0xff]
      %vm68 = vcmp.lt.f32.partialorder %v67, 192.0
      %v69 = vsub.f32 %v66, %v67
      %v70 = vand.u32 2147483647, %v69
      %vm71 = vcmp.lt.f32.partialorder %v70, 1.0
      %v72 = vmul.f32 %v69, 0.5
      %v73 = vmul.f32 %v72, %v69
      %v74 = vsub.f32 %v70, 0.5
      %v75 = vsel %vm71, %v73, %v74
      %v76 = vsel %vm68, %v75, 0.0
      %v77 = vsel %vm68, 1, 0
      %v78 = vcvt.s32.f32 %v77
      %v79 = vadd.f32 %v76, 0.0
      %v80 = vadd.f32 %v78, 0.0
      %v81 = vld [vmem:[#allocation7] sm:$0xff]
      %v82 = vadd.f32 %v81, %v79
      %83 = vst [vmem:[#allocation7] sm:$0xff] %v82
      %s84 = scalar_lea.vmem [#allocation7], 8
      %v85 = vld [vmem:[%s84] sm:$0xff]
      %v86 = vadd.f32 %v85, %v80
      %87 = vst [vmem:[%s84] sm:$0xff] %v86
    $region25: #{tpu_custom_call.1} parent=1 // pred_fallthru
      _
    %p88 = scmp.gt.s32.totalorder %s61, 8
    // Predicated region
    $region26: #{tpu_custom_call.1} parent=1 // pred_check
      %p89 = pneg %p88
    $region27: #{tpu_custom_call.1} parent=1 // pred_check_branch
      %91 = sbr.rel (%p89) target = $region29
    $region28: #{tpu_custom_call.1} parent=1 // pred_region
      %v92 = vld [vmem:[#allocation2] sm:$0xff]
      %v93 = vld [vmem:[#allocation5] sm:$0xff]
      %v94 = vlaneseq
      %v95 = vshrl.u32 %v94, 7
      %v96 = vstv %s59
      %v97 = vadd.s32 %v96, %v95
      %vm98 = vcmp.lt.f32.partialorder %v93, 192.0
      %vm99 = vcmp.lt.s32.totalorder %v97, 8
      %vm100 = vmand %vm98, %vm99
      %v101 = vsub.f32 %v92, %v93
      %v102 = vand.u32 2147483647, %v101
      %vm103 = vcmp.lt.f32.partialorder %v102, 1.0
      %v104 = vmul.f32 %v101, 0.5
      %v105 = vmul.f32 %v104, %v101
      %v106 = vsub.f32 %v102, 0.5
      %v107 = vsel %vm103, %v105, %v106
      %v108 = vsel %vm100, %v107, 0.0
      %v109 = vsel %vm100, 1, 0
      %v110 = vcvt.s32.f32 %v109
      %v111 = vadd.f32 %v108, 0.0
      %v112 = vadd.f32 %v110, 0.0
      %v113 = vld [vmem:[#allocation7] sm:$0xff]
      %v114 = vadd.f32 %v113, %v111
      %115 = vst [vmem:[#allocation7] sm:$0xff] %v114
      %s116 = scalar_lea.vmem [#allocation7], 8
      %v117 = vld [vmem:[%s116] sm:$0xff]
      %v118 = vadd.f32 %v117, %v112
      %119 = vst [vmem:[%s116] sm:$0xff] %v118
    $region29: #{tpu_custom_call.1} parent=1 // pred_fallthru
      _
    // Predicated region
    $region30: #{tpu_custom_call.1} parent=1 // pred_check
      _
    $region31: #{tpu_custom_call.1} parent=1 // pred_check_branch
      %121 = sbr.rel (0) target = $region33
    $region32: #{tpu_custom_call.1} parent=1 // pred_region
      %s123 = ssub.s32 256, 256
      %124 = vsyncadd [#allocation4], %s123
      %s125 = sshll.u32 [#allocation7], 4
      %s126 = int_to_ptr.vmem [resolvable:$true] %s125
      %131 = dma.vmem_to_hbm [thread:$0]  %s126, 256, %s2, [#allocation4], 128, 128, 8
    $region33: #{tpu_custom_call.1} parent=1 // pred_fallthru
      _
    // Predicated region
    $region34: #{tpu_custom_call.1} parent=1 // pred_check
      _
    $region35: #{tpu_custom_call.1} parent=1 // pred_check_branch
      %133 = sbr.rel (0) target = $region37
    $region36: #{tpu_custom_call.1} parent=1 // pred_region
      %134 = dma.done [#allocation4], 256
    $region37: #{tpu_custom_call.1} parent=1 // pred_fallthru
      _
    %135 = vsyncpa [#allocation3], 1
    %136 = vsyncpa [#allocation6], 1
    %137 = vsyncpa [#allocation4], 1

</llo_original>
